<compile_context>
chip_gen: v7x
topology: tpu7x:2x2x1
jax: 0.10.0
libtpu: 0.0.40
codegen_flags: <defaults>
</compile_context>

<pallas_src>
import functools

import jax
import jax.numpy as jnp
from jax.experimental import pallas as pl
from jax.experimental.pallas import tpu as pltpu


def _round_up(n: int, m: int) -> int:
    return ((n + m - 1) // m) * m


def olmo_mlp_kernel(x_ref, w_gate_ref, w_up_ref, w_down_ref, o_ref, acc_ref):
    # x_ref:      (tm, H)    token tile (same block for every k)
    # w_gate_ref: (H, ti)    gate-projection weight tile (k-th slice of I)
    # w_up_ref:   (H, ti)    up-projection weight tile   (k-th slice of I)
    # w_down_ref: (ti, H)    down-projection weight tile (k-th slice of I)
    # o_ref:      (tm, H)    output tile (resident across the k axis)
    # acc_ref:    (tm, H)    float32 accumulator scratch
    k = pl.program_id(1)

    @pl.when(k == 0)
    def _init():
        acc_ref[...] = jnp.zeros_like(acc_ref)

    x = x_ref[...]

    # gate / up projections for this I-tile: (tm, H) @ (H, ti) -> (tm, ti), f32 acc on MXU.
    gate = jnp.dot(x, w_gate_ref[...], preferred_element_type=jnp.float32)
    up = jnp.dot(x, w_up_ref[...], preferred_element_type=jnp.float32)

    # SiluAndMul in f32 on VPU/EUP (v5e has no bf16 VALU/EUP).
    act = (gate * jax.nn.sigmoid(gate)) * up

    # Partial down projection for this I-tile, accumulated in f32.
    acc_ref[...] += jnp.dot(act.astype(w_down_ref.dtype), w_down_ref[...],
                            preferred_element_type=jnp.float32)

    @pl.when(k == pl.num_programs(1) - 1)
    def _finalize():
        o_ref[...] = acc_ref[...].astype(o_ref.dtype)


def olmo_mlp(x, w_gate_up, w_down, *, tm=256, ti=512,
             vmem_limit_bytes=64 * 1024 * 1024):
    """OlmoMLP forward.

    x:         [T, H]
    w_gate_up: [H, 2*I]   merged gate+up projection weight (columns [0:I]=gate, [I:2I]=up)
    w_down:    [I, H]
    returns    [T, H]
    """
    T, H = x.shape
    two_I = w_gate_up.shape[1]
    I = two_I // 2
    assert w_gate_up.shape == (H, two_I)
    assert w_down.shape == (I, H)

    dtype = x.dtype
    # Split the merged weight outside the kernel (cheap XLA slice) so every in-kernel
    # slice is tile-aligned.
    w_gate = w_gate_up[:, :I]
    w_up = w_gate_up[:, I:]

    # --- Token-tile size: multiple of the sublane-packing granularity, padded T. ---
    sub = 16 if dtype == jnp.bfloat16 else 8
    tm_eff = max(sub, min(tm, _round_up(T, sub)))
    tm_eff = _round_up(tm_eff, sub)
    T_pad = _round_up(T, tm_eff)

    # --- Intermediate-dim tile: 128-lane aligned (or the whole I if it is small). ---
    if I <= ti:
        ti_eff = I
        I_pad = I
    else:
        ti_eff = _round_up(min(ti, I), 128)
        I_pad = _round_up(I, ti_eff)

    # --- Padding (zeros are exact: silu(0)*up contributes 0, padded w_down rows are 0). ---
    if T_pad != T:
        x = jnp.pad(x, ((0, T_pad - T), (0, 0)))
    if I_pad != I:
        w_gate = jnp.pad(w_gate, ((0, 0), (0, I_pad - I)))
        w_up = jnp.pad(w_up, ((0, 0), (0, I_pad - I)))
        w_down = jnp.pad(w_down, ((0, I_pad - I), (0, 0)))

    grid = (T_pad // tm_eff, I_pad // ti_eff)

    itemsize = jnp.dtype(dtype).itemsize
    cost = pl.CostEstimate(
        flops=6 * T * H * I,
        transcendentals=T * I,
        bytes_accessed=int(grid[0] * 3 * H * I_pad * itemsize
                           + 2 * T_pad * H * itemsize),
    )

    out_full = pl.pallas_call(
        olmo_mlp_kernel,
        out_shape=jax.ShapeDtypeStruct((T_pad, H), dtype),
        grid_spec=pltpu.PrefetchScalarGridSpec(
            num_scalar_prefetch=0,
            grid=grid,
            in_specs=[
                pl.BlockSpec((tm_eff, H), lambda i, k: (i, 0)),   # x tile
                pl.BlockSpec((H, ti_eff), lambda i, k: (0, k)),   # gate weight tile
                pl.BlockSpec((H, ti_eff), lambda i, k: (0, k)),   # up weight tile
                pl.BlockSpec((ti_eff, H), lambda i, k: (k, 0)),   # down weight tile
            ],
            out_specs=pl.BlockSpec((tm_eff, H), lambda i, k: (i, 0)),
            scratch_shapes=[pltpu.VMEM((tm_eff, H), jnp.float32)],
        ),
        compiler_params=pltpu.CompilerParams(
            dimension_semantics=("parallel", "arbitrary"),
            vmem_limit_bytes=vmem_limit_bytes,
        ),
        cost_estimate=cost,
    )(x, w_gate, w_up, w_down)

    return out_full[:T]


def olmo_mlp_ref(x, w_gate_up, w_down):
    xf = x.astype(jnp.float32)
    gf = w_gate_up.astype(jnp.float32)
    df = w_down.astype(jnp.float32)
    gate_up = xf @ gf
    I = w_down.shape[0]
    gate, up = gate_up[:, :I], gate_up[:, I:]
    act = jax.nn.silu(gate) * up
    return act @ df


def _make_inputs(key, T, H, I, dtype):
    kx, kg, kd = jax.random.split(key, 3)
    x = jax.random.normal(kx, (T, H), dtype=jnp.float32)
    w_gate_up = jax.random.normal(kg, (H, 2 * I), dtype=jnp.float32) * 0.05
    w_down = jax.random.normal(kd, (I, H), dtype=jnp.float32) * 0.05
    return x.astype(dtype), w_gate_up.astype(dtype), w_down.astype(dtype)


if __name__ == "__main__":
    key = jax.random.PRNGKey(0)

    # 1) Small f32 check: T=16, H=32, I=64 (single grid step, I fits one tile).
    x, w_gu, w_d = _make_inputs(key, T=16, H=32, I=64, dtype=jnp.float32)
    out = jax.block_until_ready(olmo_mlp(x, w_gu, w_d))
    ref = olmo_mlp_ref(x, w_gu, w_d)
    assert jnp.allclose(out, ref, atol=1e-3, rtol=1e-3), "f32 mismatch vs reference"

    # 2) f32 check exercising I-streaming (grid k=3) and T padding (40 -> 64).
    x2, w_gu2, w_d2 = _make_inputs(jax.random.PRNGKey(1), T=40, H=128, I=384,
                                   dtype=jnp.float32)
    out2 = jax.block_until_ready(olmo_mlp(x2, w_gu2, w_d2, tm=32, ti=128))
    ref2 = olmo_mlp_ref(x2, w_gu2, w_d2)
    assert jnp.allclose(out2, ref2, atol=1e-3, rtol=1e-3), "tiled f32 mismatch"

    # 3) bf16 check (bf16 into the MXU, f32 accumulation + f32 silu*up).
    x3, w_gu3, w_d3 = _make_inputs(jax.random.PRNGKey(2), T=24, H=128, I=256,
                                   dtype=jnp.bfloat16)
    out3 = jax.block_until_ready(olmo_mlp(x3, w_gu3, w_d3, tm=64, ti=128))
    ref3 = olmo_mlp_ref(x3, w_gu3, w_d3)
    assert jnp.allclose(out3.astype(jnp.float32), ref3, atol=1e-2, rtol=5e-2), \
        "bf16 mismatch vs reference"

    print("KERNEL_OK")
</pallas_src>

<mosaic_0001>
module attributes {stable_mosaic.version = 11 : i64} {
  func.func @olmo_mlp_kernel(%arg0: i32, %arg1: i32, %arg2: memref<16x32xf32, #tpu.memory_space<vmem>>, %arg3: memref<32x64xf32, #tpu.memory_space<vmem>>, %arg4: memref<32x64xf32, #tpu.memory_space<vmem>>, %arg5: memref<64x32xf32, #tpu.memory_space<vmem>>, %arg6: memref<16x32xf32, #tpu.memory_space<vmem>>, %arg7: memref<16x32xf32, #tpu.memory_space<vmem>>) attributes {dimension_semantics = [#tpu.dimension_semantics<parallel>, #tpu.dimension_semantics<arbitrary>], iteration_bounds = array<i64: 1, 1>, scalar_prefetch = 0 : i64, scratch_operands = 1 : i64, tpu.core_type = #tpu.core_type<tc>, window_params = [{transform_indices = @transform_0, window_bounds = array<i64: 16, 32>}, {transform_indices = @transform_1, window_bounds = array<i64: 32, 64>}, {transform_indices = @transform_2, window_bounds = array<i64: 32, 64>}, {transform_indices = @transform_3, window_bounds = array<i64: 64, 32>}, {transform_indices = @transform_4, window_bounds = array<i64: 16, 32>}]} {
    %c0_i32 = arith.constant 0 : i32
    %0 = arith.cmpi eq, %arg1, %c0_i32 : i32
    %1 = arith.extui %0 : i1 to i32
    %c0_i32_0 = arith.constant 0 : i32
    %2 = arith.cmpi ne, %1, %c0_i32_0 : i32
    scf.if %2 {
      %cst_17 = arith.constant 0.000000e+00 : f32
      %23 = vector.broadcast %cst_17 : f32 to vector<16x32xf32>
      %c0_18 = arith.constant 0 : index
      %c0_19 = arith.constant 0 : index
      %24 = vector.load %arg7[%c0_18, %c0_19] : memref<16x32xf32, #tpu.memory_space<vmem>>, vector<16x32xf32>
      tpu.vector_store %arg7[%c0_18, %c0_19], %23 {strides = array<i32>} : memref<16x32xf32, #tpu.memory_space<vmem>>, vector<16x32xf32>,
    } else {
    }
    %c0 = arith.constant 0 : index
    %c0_1 = arith.constant 0 : index
    %3 = vector.load %arg2[%c0, %c0_1] : memref<16x32xf32, #tpu.memory_space<vmem>>, vector<16x32xf32>
    %c0_2 = arith.constant 0 : index
    %c0_3 = arith.constant 0 : index
    %4 = vector.load %arg3[%c0_2, %c0_3] : memref<32x64xf32, #tpu.memory_space<vmem>>, vector<32x64xf32>
    %cst = arith.constant dense<0.000000e+00> : vector<16x64xf32>
    %5 = tpu.matmul %3, %4, %cst {dimension_numbers = #tpu.dot_dimension_numbers<[1], [0], [0], [1], [0, 0, 1, 1], [], []>} : vector<16x32xf32>, vector<32x64xf32>, vector<16x64xf32> -> vector<16x64xf32>
    %c0_4 = arith.constant 0 : index
    %c0_5 = arith.constant 0 : index
    %6 = vector.load %arg4[%c0_4, %c0_5] : memref<32x64xf32, #tpu.memory_space<vmem>>, vector<32x64xf32>
    %cst_6 = arith.constant dense<0.000000e+00> : vector<16x64xf32>
    %7 = tpu.matmul %3, %6, %cst_6 {dimension_numbers = #tpu.dot_dimension_numbers<[1], [0], [0], [1], [0, 0, 1, 1], [], []>} : vector<16x32xf32>, vector<32x64xf32>, vector<16x64xf32> -> vector<16x64xf32>
    %8 = arith.negf %5 : vector<16x64xf32>
    %9 = math.exp %8 : vector<16x64xf32>
    %cst_7 = arith.constant 1.000000e+00 : f32
    %10 = vector.broadcast %cst_7 : f32 to vector<16x64xf32>
    %11 = arith.addf %10, %9 : vector<16x64xf32>
    %12 = arith.divf %10, %11 : vector<16x64xf32>
    %13 = arith.mulf %5, %12 : vector<16x64xf32>
    %14 = arith.mulf %13, %7 : vector<16x64xf32>
    %c0_8 = arith.constant 0 : index
    %c0_9 = arith.constant 0 : index
    %15 = vector.load %arg7[%c0_8, %c0_9] : memref<16x32xf32, #tpu.memory_space<vmem>>, vector<16x32xf32>
    %c0_10 = arith.constant 0 : index
    %c0_11 = arith.constant 0 : index
    %16 = vector.load %arg5[%c0_10, %c0_11] : memref<64x32xf32, #tpu.memory_space<vmem>>, vector<64x32xf32>
    %cst_12 = arith.constant dense<0.000000e+00> : vector<16x32xf32>
    %17 = tpu.matmul %14, %16, %cst_12 {dimension_numbers = #tpu.dot_dimension_numbers<[1], [0], [0], [1], [0, 0, 1, 1], [], []>} : vector<16x64xf32>, vector<64x32xf32>, vector<16x32xf32> -> vector<16x32xf32>
    %18 = arith.addf %15, %17 : vector<16x32xf32>
    %c0_13 = arith.constant 0 : index
    %c0_14 = arith.constant 0 : index
    %19 = vector.load %arg7[%c0_13, %c0_14] : memref<16x32xf32, #tpu.memory_space<vmem>>, vector<16x32xf32>
    tpu.vector_store %arg7[%c0_13, %c0_14], %18 {strides = array<i32>} : memref<16x32xf32, #tpu.memory_space<vmem>>, vector<16x32xf32>,
    %c0_i32_15 = arith.constant 0 : i32
    %20 = arith.cmpi eq, %arg1, %c0_i32_15 : i32
    %21 = arith.extui %20 : i1 to i32
    %c0_i32_16 = arith.constant 0 : i32
    %22 = arith.cmpi ne, %21, %c0_i32_16 : i32
    scf.if %22 {
      %c0_17 = arith.constant 0 : index
      %c0_18 = arith.constant 0 : index
      %23 = vector.load %arg7[%c0_17, %c0_18] : memref<16x32xf32, #tpu.memory_space<vmem>>, vector<16x32xf32>
      %c0_19 = arith.constant 0 : index
      %c0_20 = arith.constant 0 : index
      %24 = vector.load %arg6[%c0_19, %c0_20] : memref<16x32xf32, #tpu.memory_space<vmem>>, vector<16x32xf32>
      tpu.vector_store %arg6[%c0_19, %c0_20], %23 {strides = array<i32>} : memref<16x32xf32, #tpu.memory_space<vmem>>, vector<16x32xf32>,
    } else {
    }
    return
  }
  func.func @transform_0(%arg0: i32, %arg1: i32) -> (i32, i32) {
    %c0_i32 = arith.constant 0 : i32
    %c0_i32_0 = arith.constant 0 : i32
    return %arg0, %c0_i32 : i32, i32
  }
  func.func @transform_1(%arg0: i32, %arg1: i32) -> (i32, i32) {
    %c0_i32 = arith.constant 0 : i32
    %c0_i32_0 = arith.constant 0 : i32
    return %c0_i32, %arg1 : i32, i32
  }
  func.func @transform_2(%arg0: i32, %arg1: i32) -> (i32, i32) {
    %c0_i32 = arith.constant 0 : i32
    %c0_i32_0 = arith.constant 0 : i32
    return %c0_i32, %arg1 : i32, i32
  }
  func.func @transform_3(%arg0: i32, %arg1: i32) -> (i32, i32) {
    %c0_i32 = arith.constant 0 : i32
    %c0_i32_0 = arith.constant 0 : i32
    return %arg1, %c0_i32 : i32, i32
  }
  func.func @transform_4(%arg0: i32, %arg1: i32) -> (i32, i32) {
    %c0_i32 = arith.constant 0 : i32
    %c0_i32_0 = arith.constant 0 : i32
    return %arg0, %c0_i32 : i32, i32
  }
}

</mosaic_0001>

<llo_original>
// kernel: tpu_custom_call.1
$region0: #{tpu_custom_call.1}
  #allocation0 [shape = 'u32[]', space=smem, size = 0x4, offset = 0x4, fixed_abs, tag = 'smem constant byte address 0x4 - core index']
  #allocation1 [shape = 'u32[144,128]{1,0:T(1,128)}', space=vmem, size = 0x12000, scoped, tag = 'internal scratch']
  #allocation2 [shape = 'f32[16,32]{1,0:T(8,128)}', space=vmem, size = 0x2000, scoped, tag = 'scratch operand']
  %s0 = inlined_call_operand.hbm [shape: f32[16,32], index: 0, kind: input, shape index: {}]
  %s1 = inlined_call_operand.hbm [shape: f32[32,64], index: 1, kind: input, shape index: {}]
  %s2 = inlined_call_operand.hbm [shape: f32[32,64], index: 2, kind: input, shape index: {}]
  %s3 = inlined_call_operand.hbm [shape: f32[64,32], index: 3, kind: input, shape index: {}]
  %s4 = inlined_call_operand.hbm [shape: f32[16,32], index: 4, kind: output, shape index: {}]
  %s5 = sld [smem:[#allocation0]]
  $region50: #{tpu_custom_call.1} parent=0
    _
  %s7 = ssub.s32 1, %s5
  %s8 = scalar_select 0, %s7, %s5
  $region1: #{tpu_custom_call.1} parent=0
    #allocation3 [shape = 'u8[8192]{0}', space=vmem, size = 0x2000, scoped, tag = 'input window, operand 0, single buffered']
    #allocation4 [shape = 's32[1]{0}', space=sflag, size = 0x4, scoped, tag = 'scoped memory for tpu_custom_call.1']
    #allocation5 [shape = 's32[1]{0}', space=sflag, size = 0x4, scoped, tag = 'scoped memory for tpu_custom_call.1']
    #allocation6 [shape = 'u8[16384]{0}', space=vmem, size = 0x4000, scoped, tag = 'input window, operand 1, single buffered']
    #allocation7 [shape = 's32[1]{0}', space=sflag, size = 0x4, scoped, tag = 'scoped memory for tpu_custom_call.1']
    #allocation8 [shape = 'u8[16384]{0}', space=vmem, size = 0x4000, scoped, tag = 'input window, operand 2, single buffered']
    #allocation9 [shape = 'u8[32768]{0}', space=vmem, size = 0x8000, scoped, tag = 'input window, operand 3, single buffered']
    #allocation10 [shape = 's32[1]{0}', space=sflag, size = 0x4, scoped, tag = 'scoped memory for tpu_custom_call.1']
    #allocation11 [shape = 'u8[8192]{0}', space=vmem, size = 0x2000, scoped, tag = 'output window, operand 0, single buffered']
    %9 = vsyncpa [#allocation4], 0
    %10 = vsyncpa [#allocation7], 0
    %11 = vsyncpa [#allocation10], 0
    %12 = vsyncpa [#allocation5], 0
    // Predicated region
    $region2: #{tpu_custom_call.1} parent=1 // pred_check
      _
    $region3: #{tpu_custom_call.1} parent=1 // pred_check_branch
      %14 = sbr.rel (0) target = $region5
    $region4: #{tpu_custom_call.1} parent=1 // pred_region
      %s16 = ssub.s32 256, 256
      %17 = vsyncadd [#allocation4], %s16
      %s18 = sshll.u32 [#allocation3], 4
      %s19 = int_to_ptr.vmem [resolvable:$true] %s18
      %24 = dma.hbm_to_vmem [thread:$0]  %s0, 256, %s19, [#allocation4], 128, 128, 8
    $region5: #{tpu_custom_call.1} parent=1 // pred_fallthru
      _
    // Predicated region
    $region6: #{tpu_custom_call.1} parent=1 // pred_check
      _
    $region7: #{tpu_custom_call.1} parent=1 // pred_check_branch
      %26 = sbr.rel (0) target = $region9
    $region8: #{tpu_custom_call.1} parent=1 // pred_region
      %s28 = ssub.s32 512, 512
      %29 = vsyncadd [#allocation7], %s28
      %s30 = sshll.u32 [#allocation6], 4
      %s31 = int_to_ptr.vmem [resolvable:$true] %s30
      %36 = dma.hbm_to_vmem [thread:$0]  %s1, 512, %s31, [#allocation7], 128, 128, 8
    $region9: #{tpu_custom_call.1} parent=1 // pred_fallthru
      _
    // Predicated region
    $region10: #{tpu_custom_call.1} parent=1 // pred_check
      _
    $region11: #{tpu_custom_call.1} parent=1 // pred_check_branch
      %38 = sbr.rel (0) target = $region13
    $region12: #{tpu_custom_call.1} parent=1 // pred_region
      %s40 = ssub.s32 512, 512
      %41 = vsyncadd [#allocation7], %s40
      %s42 = sshll.u32 [#allocation8], 4
      %s43 = int_to_ptr.vmem [resolvable:$true] %s42
      %48 = dma.hbm_to_vmem [thread:$0]  %s2, 512, %s43, [#allocation7], 128, 128, 8
    $region13: #{tpu_custom_call.1} parent=1 // pred_fallthru
      _
    // Predicated region
    $region14: #{tpu_custom_call.1} parent=1 // pred_check
      _
    $region15: #{tpu_custom_call.1} parent=1 // pred_check_branch
      %50 = sbr.rel (0) target = $region17
    $region16: #{tpu_custom_call.1} parent=1 // pred_region
      %s52 = ssub.s32 1024, 1024
      %53 = vsyncadd [#allocation10], %s52
      %s54 = sshll.u32 [#allocation9], 4
      %s55 = int_to_ptr.vmem [resolvable:$true] %s54
      %60 = dma.hbm_to_vmem [thread:$0]  %s3, 1024, %s55, [#allocation10], 128, 128, 8
    $region17: #{tpu_custom_call.1} parent=1 // pred_fallthru
      _
    // Predicated region
    $region18: #{tpu_custom_call.1} parent=1 // pred_check
      _
    $region19: #{tpu_custom_call.1} parent=1 // pred_check_branch
      %62 = sbr.rel (0) target = $region21
    $region20: #{tpu_custom_call.1} parent=1 // pred_region
      %63 = dma.done [#allocation4], 256
    $region21: #{tpu_custom_call.1} parent=1 // pred_fallthru
      _
    // Predicated region
    $region22: #{tpu_custom_call.1} parent=1 // pred_check
      _
    $region23: #{tpu_custom_call.1} parent=1 // pred_check_branch
      %65 = sbr.rel (0) target = $region25
    $region24: #{tpu_custom_call.1} parent=1 // pred_region
      %66 = dma.done [#allocation7], 512
    $region25: #{tpu_custom_call.1} parent=1 // pred_fallthru
      _
    // Predicated region
    $region26: #{tpu_custom_call.1} parent=1 // pred_check
      _
    $region27: #{tpu_custom_call.1} parent=1 // pred_check_branch
      %68 = sbr.rel (0) target = $region29
    $region28: #{tpu_custom_call.1} parent=1 // pred_region
      %69 = dma.done [#allocation7], 512
    $region29: #{tpu_custom_call.1} parent=1 // pred_fallthru
      _
    // Predicated region
    $region30: #{tpu_custom_call.1} parent=1 // pred_check
      _
    $region31: #{tpu_custom_call.1} parent=1 // pred_check_branch
      %71 = sbr.rel (0) target = $region33
    $region32: #{tpu_custom_call.1} parent=1 // pred_region
      %72 = dma.done [#allocation10], 1024
    $region33: #{tpu_custom_call.1} parent=1 // pred_fallthru
      _
    %p73 = scmp.eq.s32.totalorder 0, 0
    // Predicated region
    $region34: #{tpu_custom_call.1} parent=1 // pred_check
      %p74 = pneg %p73
    $region35: #{tpu_custom_call.1} parent=1 // pred_check_branch
      %76 = sbr.rel (%p74) target = $region37
    $region36: #{tpu_custom_call.1} parent=1 // pred_region
      %vm77 = vcmask 261120
      %78 = vst.msk [vmem:[#allocation2] sm:$0xff] %vm77, 0.0
      %79 = vst.msk [vmem:[#allocation2 + $0x8] sm:$0xff] %vm77, 0.0
    $region37: #{tpu_custom_call.1} parent=1 // pred_fallthru
      _
    %v80 = vld [vmem:[#allocation3] sm:$0xff]
    %v81 = vld [vmem:[#allocation3 + $0x8] sm:$0xff]
    %v82 = vld [vmem:[#allocation6] sm:$0xff]
    %v83 = vld [vmem:[#allocation6 + $0x8] sm:$0xff]
    %v84 = vld [vmem:[#allocation6 + $0x10] sm:$0xff]
    %v85 = vld [vmem:[#allocation6 + $0x18] sm:$0xff]
    %vm86 = vcmask 261120
    %v88 = vsel %vm86, %v80, 0
    %v91 = vsel %vm86, %v81, 0
    %93 = vmatprep.subr.mxu0 0.0
    %94 = vmatpush1.msra.mxu0 %v82
    %95 = vmatprep.subr.mxu0 0.0
    %96 = vmatpush1.msra.mxu0 %v83
    %97 = vmatprep.subr.mxu0 0.0
    %98 = vmatpush1.msra.mxu0 %v84
    %99 = vmatprep.subr.mxu0 0.0
    %100 = vmatpush1.msra.mxu0 %v85
    %101 = vmatprep.subr.mxu0 0.0
    %102 = vmatpush1.msra.mxu0 0.0
    %103 = vmatprep.subr.mxu0 0.0
    %104 = vmatpush1.msra.mxu0 0.0
    %105 = vmatprep.subr.mxu0 0.0
    %106 = vmatpush1.msra.mxu0 0.0
    %107 = vmatprep.subr.mxu0 0.0
    %108 = vmatpush1.msra.mxu0 0.0
    %109 = vmatprep.subr.mxu0 0.0
    %110 = vmatpush1.msra.mxu0 0.0
    %111 = vmatprep.subr.mxu0 0.0
    %112 = vmatpush1.msra.mxu0 0.0
    %113 = vmatprep.subr.mxu0 0.0
    %114 = vmatpush1.msra.mxu0 0.0
    %115 = vmatprep.subr.mxu0 0.0
    %116 = vmatpush1.msra.mxu0 0.0
    %117 = vmatprep.subr.mxu0 0.0
    %118 = vmatpush1.msra.mxu0 0.0
    %119 = vmatprep.subr.mxu0 0.0
    %120 = vmatpush1.msra.mxu0 0.0
    %121 = vmatprep.subr.mxu0 0.0
    %122 = vmatpush1.msra.mxu0 0.0
    %123 = vmatprep.subr.mxu0 0.0
    %124 = vmatpush1.msra.mxu0 0.0
    %125 = vmatprep.subr.mxu0 0.0
    %126 = vmatpush1.msra.mxu0 0.0
    %127 = vmatprep.subr.mxu0 0.0
    %128 = vmatpush1.msra.mxu0 0.0
    %129 = vmatprep.subr.mxu0 0.0
    %130 = vmatpush1.msra.mxu0 0.0
    %131 = vmatprep.subr.mxu0 0.0
    %132 = vmatpush1.msra.mxu0 0.0
    %133 = vmatprep.subr.mxu0 0.0
    %134 = vmatpush1.msra.mxu0 0.0
    %135 = vmatprep.subr.mxu0 0.0
    %136 = vmatpush1.msra.mxu0 0.0
    %137 = vmatprep.subr.mxu0 0.0
    %138 = vmatpush1.msra.mxu0 0.0
    %139 = vmatprep.subr.mxu0 0.0
    %140 = vmatpush1.msra.mxu0 0.0
    %141 = vmatprep.subr.mxu0 0.0
    %142 = vmatpush1.msra.mxu0 0.0
    %143 = vmatprep.subr.mxu0 0.0
    %144 = vmatpush1.msra.mxu0 0.0
    %145 = vmatprep.subr.mxu0 0.0
    %146 = vmatpush1.msra.mxu0 0.0
    %147 = vmatprep.subr.mxu0 0.0
    %148 = vmatpush1.msra.mxu0 0.0
    %149 = vmatprep.subr.mxu0 0.0
    %150 = vmatpush1.msra.mxu0 0.0
    %151 = vmatprep.subr.mxu0 0.0
    %152 = vmatpush1.msra.mxu0 0.0
    %153 = vmatprep.subr.mxu0 0.0
    %154 = vmatpush1.msra.mxu0 0.0
    %155 = vmatprep.subr.mxu0 0.0
    %156 = vmatpush1.msra.mxu0 0.0
    %157 = vmatprep.mubr.f32.mxu0 0.0
    %158 = vmatmul.mubr.f32.gmra.mrb[0].mxu0 %v88
    %v159 = vpop.f32.mrb[0].mxu0
    %v160 = vadd.f32 0.0, %v159
    %v161 = vpop.f32.mrb[0].mxu0
    %162 = vmatprep.mubr.f32.mxu0 0.0
    %163 = vmatmul.mubr.f32.gmra.mrb[0].mxu0 %v91
    %v164 = vpop.f32.mrb[0].mxu0
    %v165 = vadd.f32 0.0, %v164
    %v166 = vpop.f32.mrb[0].mxu0
    %167 = vdwg.mxu0
    %v168 = vld [vmem:[#allocation8] sm:$0xff]
    %v169 = vld [vmem:[#allocation8 + $0x8] sm:$0xff]
    %v170 = vld [vmem:[#allocation8 + $0x10] sm:$0xff]
    %v171 = vld [vmem:[#allocation8 + $0x18] sm:$0xff]
    %172 = vmatprep.subr.mxu0 0.0
    %173 = vmatpush1.msra.mxu0 %v168
    %174 = vmatprep.subr.mxu0 0.0
    %175 = vmatpush1.msra.mxu0 %v169
    %176 = vmatprep.subr.mxu0 0.0
    %177 = vmatpush1.msra.mxu0 %v170
    %178 = vmatprep.subr.mxu0 0.0
    %179 = vmatpush1.msra.mxu0 %v171
    %180 = vmatprep.subr.mxu0 0.0
    %181 = vmatpush1.msra.mxu0 0.0
    %182 = vmatprep.subr.mxu0 0.0
    %183 = vmatpush1.msra.mxu0 0.0
    %184 = vmatprep.subr.mxu0 0.0
    %185 = vmatpush1.msra.mxu0 0.0
    %186 = vmatprep.subr.mxu0 0.0
    %187 = vmatpush1.msra.mxu0 0.0
    %188 = vmatprep.subr.mxu0 0.0
    %189 = vmatpush1.msra.mxu0 0.0
    %190 = vmatprep.subr.mxu0 0.0
    %191 = vmatpush1.msra.mxu0 0.0
    %192 = vmatprep.subr.mxu0 0.0
    %193 = vmatpush1.msra.mxu0 0.0
    %194 = vmatprep.subr.mxu0 0.0
    %195 = vmatpush1.msra.mxu0 0.0
    %196 = vmatprep.subr.mxu0 0.0
    %197 = vmatpush1.msra.mxu0 0.0
    %198 = vmatprep.subr.mxu0 0.0
    %199 = vmatpush1.msra.mxu0 0.0
    %200 = vmatprep.subr.mxu0 0.0
    %201 = vmatpush1.msra.mxu0 0.0
    %202 = vmatprep.subr.mxu0 0.0
    %203 = vmatpush1.msra.mxu0 0.0
    %204 = vmatprep.subr.mxu0 0.0
    %205 = vmatpush1.msra.mxu0 0.0
    %206 = vmatprep.subr.mxu0 0.0
    %207 = vmatpush1.msra.mxu0 0.0
    %208 = vmatprep.subr.mxu0 0.0
    %209 = vmatpush1.msra.mxu0 0.0
    %210 = vmatprep.subr.mxu0 0.0
    %211 = vmatpush1.msra.mxu0 0.0
    %212 = vmatprep.subr.mxu0 0.0
    %213 = vmatpush1.msra.mxu0 0.0
    %214 = vmatprep.subr.mxu0 0.0
    %215 = vmatpush1.msra.mxu0 0.0
    %216 = vmatprep.subr.mxu0 0.0
    %217 = vmatpush1.msra.mxu0 0.0
    %218 = vmatprep.subr.mxu0 0.0
    %219 = vmatpush1.msra.mxu0 0.0
    %220 = vmatprep.subr.mxu0 0.0
    %221 = vmatpush1.msra.mxu0 0.0
    %222 = vmatprep.subr.mxu0 0.0
    %223 = vmatpush1.msra.mxu0 0.0
    %224 = vmatprep.subr.mxu0 0.0
    %225 = vmatpush1.msra.mxu0 0.0
    %226 = vmatprep.subr.mxu0 0.0
    %227 = vmatpush1.msra.mxu0 0.0
    %228 = vmatprep.subr.mxu0 0.0
    %229 = vmatpush1.msra.mxu0 0.0
    %230 = vmatprep.subr.mxu0 0.0
    %231 = vmatpush1.msra.mxu0 0.0
    %232 = vmatprep.subr.mxu0 0.0
    %233 = vmatpush1.msra.mxu0 0.0
    %234 = vmatprep.subr.mxu0 0.0
    %235 = vmatpush1.msra.mxu0 0.0
    %236 = vmatprep.mubr.f32.mxu0 0.0
    %237 = vmatmul.mubr.f32.gmra.mrb[0].mxu0 %v88
    %v238 = vpop.f32.mrb[0].mxu0
    %v239 = vadd.f32 0.0, %v238
    %v240 = vpop.f32.mrb[0].mxu0
    %241 = vmatprep.mubr.f32.mxu0 0.0
    %242 = vmatmul.mubr.f32.gmra.mrb[0].mxu0 %v91
    %v243 = vpop.f32.mrb[0].mxu0
    %v244 = vadd.f32 0.0, %v243
    %v245 = vpop.f32.mrb[0].mxu0
    %246 = vdwg.mxu0
    %v247 = vxor.u32 %v160, 2147483648
    %v248 = vxor.u32 %v165, 2147483648
    %v249 = vmul.f32 %v247, 1.442695
    %v250 = vpow.pop %v249
    %v251 = vmul.f32 %v248, 1.442695
    %v252 = vpow.pop %v251
    %v253 = vadd.f32 %v250, 1.0
    %v254 = vadd.f32 %v252, 1.0
    %v255 = vrcp.pop %v253
    %v256 = vmul.f32 1.0, %v255
    %v257 = vrcp.pop %v254
    %v258 = vmul.f32 1.0, %v257
    %v259 = vmul.f32 %v160, %v256
    %v260 = vmul.f32 %v165, %v258
    %v261 = vmul.f32 %v259, %v239
    %v262 = vmul.f32 %v260, %v244
    %v263 = vld [vmem:[#allocation2] sm:$0xff]
    %v264 = vld [vmem:[#allocation2 + $0x8] sm:$0xff]
    %v265 = vld [vmem:[#allocation9] sm:$0xff]
    %v266 = vld [vmem:[#allocation9 + $0x8] sm:$0xff]
    %v267 = vld [vmem:[#allocation9 + $0x10] sm:$0xff]
    %v268 = vld [vmem:[#allocation9 + $0x18] sm:$0xff]
    %v269 = vld [vmem:[#allocation9 + $0x20] sm:$0xff]
    %v270 = vld [vmem:[#allocation9 + $0x28] sm:$0xff]
    %v271 = vld [vmem:[#allocation9 + $0x30] sm:$0xff]
    %v272 = vld [vmem:[#allocation9 + $0x38] sm:$0xff]
    %vm273 = vcmask 523264
    %v275 = vsel %vm273, %v261, 0
    %v278 = vsel %vm273, %v262, 0
    %280 = vmatprep.subr.mxu0 0.0
    %281 = vmatpush1.msra.mxu0 %v265
    %282 = vmatprep.subr.mxu0 0.0
    %283 = vmatpush1.msra.mxu0 %v266
    %284 = vmatprep.subr.mxu0 0.0
    %285 = vmatpush1.msra.mxu0 %v267
    %286 = vmatprep.subr.mxu0 0.0
    %287 = vmatpush1.msra.mxu0 %v268
    %288 = vmatprep.subr.mxu0 0.0
    %289 = vmatpush1.msra.mxu0 %v269
    %290 = vmatprep.subr.mxu0 0.0
    %291 = vmatpush1.msra.mxu0 %v270
    %292 = vmatprep.subr.mxu0 0.0
    %293 = vmatpush1.msra.mxu0 %v271
    %294 = vmatprep.subr.mxu0 0.0
    %295 = vmatpush1.msra.mxu0 %v272
    %296 = vmatprep.subr.mxu0 0.0
    %297 = vmatpush1.msra.mxu0 0.0
    %298 = vmatprep.subr.mxu0 0.0
    %299 = vmatpush1.msra.mxu0 0.0
    %300 = vmatprep.subr.mxu0 0.0
    %301 = vmatpush1.msra.mxu0 0.0
    %302 = vmatprep.subr.mxu0 0.0
    %303 = vmatpush1.msra.mxu0 0.0
    %304 = vmatprep.subr.mxu0 0.0
    %305 = vmatpush1.msra.mxu0 0.0
    %306 = vmatprep.subr.mxu0 0.0
    %307 = vmatpush1.msra.mxu0 0.0
    %308 = vmatprep.subr.mxu0 0.0
    %309 = vmatpush1.msra.mxu0 0.0
    %310 = vmatprep.subr.mxu0 0.0
    %311 = vmatpush1.msra.mxu0 0.0
    %312 = vmatprep.subr.mxu0 0.0
    %313 = vmatpush1.msra.mxu0 0.0
    %314 = vmatprep.subr.mxu0 0.0
    %315 = vmatpush1.msra.mxu0 0.0
    %316 = vmatprep.subr.mxu0 0.0
    %317 = vmatpush1.msra.mxu0 0.0
    %318 = vmatprep.subr.mxu0 0.0
    %319 = vmatpush1.msra.mxu0 0.0
    %320 = vmatprep.subr.mxu0 0.0
    %321 = vmatpush1.msra.mxu0 0.0
    %322 = vmatprep.subr.mxu0 0.0
    %323 = vmatpush1.msra.mxu0 0.0
    %324 = vmatprep.subr.mxu0 0.0
    %325 = vmatpush1.msra.mxu0 0.0
    %326 = vmatprep.subr.mxu0 0.0
    %327 = vmatpush1.msra.mxu0 0.0
    %328 = vmatprep.subr.mxu0 0.0
    %329 = vmatpush1.msra.mxu0 0.0
    %330 = vmatprep.subr.mxu0 0.0
    %331 = vmatpush1.msra.mxu0 0.0
    %332 = vmatprep.subr.mxu0 0.0
    %333 = vmatpush1.msra.mxu0 0.0
    %334 = vmatprep.subr.mxu0 0.0
    %335 = vmatpush1.msra.mxu0 0.0
    %336 = vmatprep.subr.mxu0 0.0
    %337 = vmatpush1.msra.mxu0 0.0
    %338 = vmatprep.subr.mxu0 0.0
    %339 = vmatpush1.msra.mxu0 0.0
    %340 = vmatprep.subr.mxu0 0.0
    %341 = vmatpush1.msra.mxu0 0.0
    %342 = vmatprep.subr.mxu0 0.0
    %343 = vmatpush1.msra.mxu0 0.0
    %344 = vmatprep.mubr.f32.mxu0 0.0
    %345 = vmatmul.mubr.f32.gmra.mrb[0].mxu0 %v275
    %v346 = vpop.f32.mrb[0].mxu0
    %v347 = vadd.f32 0.0, %v346
    %v348 = vpop.f32.mrb[0].mxu0
    %349 = vmatprep.mubr.f32.mxu0 0.0
    %350 = vmatmul.mubr.f32.gmra.mrb[0].mxu0 %v278
    %v351 = vpop.f32.mrb[0].mxu0
    %v352 = vadd.f32 0.0, %v351
    %v353 = vpop.f32.mrb[0].mxu0
    %354 = vdwg.mxu0
    %v355 = vadd.f32 %v263, %v347
    %v356 = vadd.f32 %v264, %v352
    %357 = vst.msk [vmem:[#allocation2] sm:$0xff] %vm86, %v355
    %358 = vst.msk [vmem:[#allocation2 + $0x8] sm:$0xff] %vm86, %v356
    // Predicated region
    $region38: #{tpu_custom_call.1} parent=1 // pred_check
      %p359 = pneg %p73
    $region39: #{tpu_custom_call.1} parent=1 // pred_check_branch
      %361 = sbr.rel (%p359) target = $region41
    $region40: #{tpu_custom_call.1} parent=1 // pred_region
      %v362 = vld [vmem:[#allocation2] sm:$0xff]
      %v363 = vld [vmem:[#allocation2 + $0x8] sm:$0xff]
      %364 = vst.msk [vmem:[#allocation11] sm:$0xff] %vm86, %v362
      %365 = vst.msk [vmem:[#allocation11 + $0x8] sm:$0xff] %vm86, %v363
    $region41: #{tpu_custom_call.1} parent=1 // pred_fallthru
      _
    // Predicated region
    $region42: #{tpu_custom_call.1} parent=1 // pred_check
      _
    $region43: #{tpu_custom_call.1} parent=1 // pred_check_branch
      %367 = sbr.rel (0) target = $region45
    $region44: #{tpu_custom_call.1} parent=1 // pred_region
      %s369 = ssub.s32 256, 256
      %370 = vsyncadd [#allocation5], %s369
      %s371 = sshll.u32 [#allocation11], 4
      %s372 = int_to_ptr.vmem [resolvable:$true] %s371
      %377 = dma.vmem_to_hbm [thread:$0]  %s372, 256, %s4, [#allocation5], 128, 128, 8
    $region45: #{tpu_custom_call.1} parent=1 // pred_fallthru
      _
    // Predicated region
    $region46: #{tpu_custom_call.1} parent=1 // pred_check
      _
    $region47: #{tpu_custom_call.1} parent=1 // pred_check_branch
      %379 = sbr.rel (0) target = $region49
    $region48: #{tpu_custom_call.1} parent=1 // pred_region
      %380 = dma.done [#allocation5], 256
    $region49: #{tpu_custom_call.1} parent=1 // pred_fallthru
      _
    %381 = vsyncpa [#allocation4], 1
    %382 = vsyncpa [#allocation7], 1
    %383 = vsyncpa [#allocation10], 1
    %384 = vsyncpa [#allocation5], 1

</llo_original>
